<compile_context>
chip_gen: v5e
topology: v5e:2x2
jax: 0.10.0
libtpu: 0.0.40
codegen_flags: <defaults>
</compile_context>

<pallas_src>
import functools

import jax
import jax.numpy as jnp
from jax.experimental import pallas as pl
from jax.experimental.pallas import tpu as pltpu

EPS = 1e-5  # nn.LayerNorm default


def _round_up(a, m):
    return ((a + m - 1) // m) * m


def _spec(shape, index_map, single_buffer=False):
    """BlockSpec helper: single-buffer resident (constant index_map) operands."""
    if single_buffer:
        try:
            return pl.BlockSpec(shape, index_map, pipeline_mode=pl.Buffered(1))
        except TypeError:  # very old jax without pipeline_mode
            return pl.BlockSpec(shape, index_map)
    return pl.BlockSpec(shape, index_map)


def prenorm_residual_kernel(x_ref, gamma_ref, beta_ref, w_ref, b_ref, o_ref,
                            y_ref, *, d_actual, tn, compute_dtype):
    # x_ref:     (tm, Dp)  row tile (resident across the column axis)
    # gamma/beta (1, Dp)   f32, resident across the whole grid
    # w_ref:     (Dp, tn)  one output-column tile of the weight (compute dtype)
    # b_ref:     (1, tn)   f32 bias column tile
    # o_ref:     (tm, tn)  output tile
    # y_ref:     (tm, Dp)  VMEM scratch holding LayerNorm(x) for this row tile
    j = pl.program_id(1)

    # --- LayerNorm once per row tile, reused for every column tile ---------
    @pl.when(j == 0)
    def _():
        x = x_ref[...].astype(jnp.float32)
        dp = x.shape[-1]
        inv_d = jnp.float32(1.0 / d_actual)
        if dp == d_actual:
            mean = jnp.mean(x, axis=-1, keepdims=True)
            centered = x - mean
            var = jnp.mean(jnp.square(centered), axis=-1, keepdims=True)
        else:
            # Padded lanes of x / gamma / beta / w / b are zero-filled by the
            # wrapper, so sum/D is the true mean and masking the centered
            # values gives the true (biased) variance.  Do NOT change the pad
            # values without updating this.
            lane = jax.lax.broadcasted_iota(jnp.int32, (1, dp), 1)
            valid = lane < d_actual
            mean = jnp.sum(x, axis=-1, keepdims=True) * inv_d
            centered = jnp.where(valid, x - mean, 0.0)
            var = jnp.sum(jnp.square(centered), axis=-1, keepdims=True) * inv_d
        xn = centered * jax.lax.rsqrt(var + EPS)       # rsqrt -> EUP slot
        y_ref[...] = (xn * gamma_ref[...] + beta_ref[...]).astype(compute_dtype)

    # --- fn = Linear(dim, dim): one output-column tile on the MXU ----------
    out = jnp.dot(y_ref[...], w_ref[...], preferred_element_type=jnp.float32)

    # --- bias + residual: re-read x from the resident VMEM tile (no f32 copy
    #     of x is kept live across the matmul) ------------------------------
    col0 = pl.multiple_of(j * tn, 128)
    x_res = x_ref[:, pl.ds(col0, tn)].astype(jnp.float32)
    o_ref[...] = (out + b_ref[...] + x_res).astype(o_ref.dtype)


def prenorm_residual(x, gamma, beta, w, b, *, tm=None, allow_bf16_matmul=False):
    """x: (B, N, D); gamma, beta: (D,); w: (D, D); b: (D,)."""
    B, N, D = x.shape
    M = B * N
    x_itemsize = jnp.dtype(x.dtype).itemsize

    # Matmul dtype: bf16 MXU path when activations are bf16 (or explicitly
    # allowed for f32 activations -- changes numerics, so it is opt-in).
    compute_dtype = (jnp.bfloat16
                     if (x.dtype == jnp.bfloat16 or allow_bf16_matmul)
                     else jnp.float32)
    c_itemsize = jnp.dtype(compute_dtype).itemsize

    # Lane-dense feature width (multiple of 128); skipped when already dense.
    Dp = _round_up(D, 128)

    # Physical VMEM drives residency / limits (64 MiB per TC on v7x).
    try:
        vmem_cap = int(pltpu.get_tpu_info().vmem_capacity_bytes)
    except Exception:  # pragma: no cover - conservative fallback
        vmem_cap = 64 * 1024 * 1024

    # Weight residency: keep the full (Dp, Dp) weight resident when it fits in
    # a quarter of VMEM; otherwise tile over output columns (full-K matmuls,
    # no reduction axis / f32 accumulator needed).
    w_full_bytes = Dp * Dp * c_itemsize
    if w_full_bytes <= vmem_cap // 4:
        tn = Dp
    else:
        tn = next(t for t in (512, 256, 128) if Dp % t == 0)
    n_col = Dp // tn

    # Regime-aware row tile: memory-bound (small D) wants big tiles to
    # amortise the ~0.35us/step overhead; compute-bound (large D) uses 256.
    if tm is None:
        tm = 512 if D <= 1024 else 256

    # Rows padded only to a sublane multiple (8).  A trailing partial row tile
    # is handled by Pallas boundary masking, so no full-tensor pad pass.
    M_pad = _round_up(M, 8)
    tm_eff = min(tm, M_pad)
    n_row = pl.cdiv(M_pad, tm_eff)

    x2 = x.reshape(M, D)
    if (M_pad, Dp) != (M, D):
        x2 = jnp.pad(x2, ((0, M_pad - M), (0, Dp - D)))  # zero-fill (required by LN mask)

    def _pad_vec(v):
        v = v.astype(jnp.float32)
        if Dp != D:
            v = jnp.pad(v, (0, Dp - D))
        return v.reshape(1, Dp)

    gamma2, beta2, b2 = _pad_vec(gamma), _pad_vec(beta), _pad_vec(b)

    # Weight pre-cast once in the wrapper (no per-step casts in the kernel).
    w2 = w.astype(compute_dtype)
    if Dp != D:
        w2 = jnp.pad(w2, ((0, Dp - D), (0, Dp - D)))

    weight_resident = (n_col == 1)

    # VMEM budget: double-buffered x/out tiles, weight tile(s), y scratch and
    # headroom for the f32 LayerNorm temporaries.  Cap at ~85% of physical.
    needed = (2 * tm_eff * Dp * x_itemsize                       # x tiles
              + (1 if weight_resident else 2) * Dp * tn * c_itemsize  # weight
              + 2 * tm_eff * tn * x_itemsize                     # out tiles
              + tm_eff * Dp * c_itemsize                         # y scratch
              + 3 * tm_eff * Dp * 4                              # f32 temps
              + (2 << 20))
    vmem_limit = int(min(max(needed, 32 * 1024 * 1024), int(0.85 * vmem_cap)))

    kernel = functools.partial(prenorm_residual_kernel, d_actual=D, tn=tn,
                               compute_dtype=compute_dtype)

    out = pl.pallas_call(
        kernel,
        out_shape=jax.ShapeDtypeStruct((M_pad, Dp), x.dtype),
        grid_spec=pltpu.PrefetchScalarGridSpec(
            num_scalar_prefetch=0,
            grid=(n_row, n_col),
            in_specs=[
                _spec((tm_eff, Dp), lambda i, j: (i, 0)),                      # x row tile
                _spec((1, Dp), lambda i, j: (0, 0), single_buffer=True),       # gamma (f32)
                _spec((1, Dp), lambda i, j: (0, 0), single_buffer=True),       # beta  (f32)
                _spec((Dp, tn), lambda i, j: (0, j),
                      single_buffer=weight_resident),                          # weight
                _spec((1, tn), lambda i, j: (0, j),
                      single_buffer=weight_resident),                          # bias  (f32)
            ],
            out_specs=pl.BlockSpec((tm_eff, tn), lambda i, j: (i, j)),
            scratch_shapes=[pltpu.VMEM((tm_eff, Dp), compute_dtype)],          # LN(x) scratch
        ),
        compiler_params=pltpu.CompilerParams(
            dimension_semantics=("parallel", "arbitrary"),
            vmem_limit_bytes=vmem_limit,
        ),
    )(x2, gamma2, beta2, w2, b2)

    if (M_pad, Dp) != (M, D):
        out = out[:M, :D]
    return out.reshape(B, N, D)


def reference(x, gamma, beta, w, b):
    xf = x.astype(jnp.float32)
    mean = jnp.mean(xf, axis=-1, keepdims=True)
    var = jnp.mean(jnp.square(xf - mean), axis=-1, keepdims=True)
    y = (xf - mean) * jax.lax.rsqrt(var + EPS) * gamma + beta
    return (y @ w.astype(jnp.float32) + b + xf).astype(x.dtype)


if __name__ == "__main__":
    B, N, D = 2, 8, 32
    key = jax.random.PRNGKey(0)
    kx, kw, kb = jax.random.split(key, 3)

    x = jax.random.normal(kx, (B, N, D), dtype=jnp.float32)

    # LayerNorm params: PyTorch default init (ones / zeros).
    gamma = jnp.ones((D,), jnp.float32)
    beta = jnp.zeros((D,), jnp.float32)

    # TODO(synk): `fn` is an arbitrary module in the PyTorch spec; it is
    # instantiated here as the canonical Linear(dim, dim).
    bound = 1.0 / (D ** 0.5)
    w = jax.random.uniform(kw, (D, D), jnp.float32, -bound, bound)
    b = jax.random.uniform(kb, (D,), jnp.float32, -bound, bound)

    out = prenorm_residual(x, gamma, beta, w, b)
    out = jax.block_until_ready(out)

    ref = reference(x, gamma, beta, w, b)
    assert out.shape == (B, N, D)
    assert jnp.allclose(out, ref, atol=1e-4, rtol=1e-4), (
        float(jnp.max(jnp.abs(out - ref))))

    print("KERNEL_OK")
</pallas_src>

<mosaic_0001>
module attributes {stable_mosaic.version = 11 : i64} {
  func.func @prenorm_residual_kernel(%arg0: i32, %arg1: i32, %arg2: memref<16x128xf32, #tpu.memory_space<vmem>>, %arg3: memref<1x128xf32, #tpu.memory_space<vmem>>, %arg4: memref<1x128xf32, #tpu.memory_space<vmem>>, %arg5: memref<128x128xf32, #tpu.memory_space<vmem>>, %arg6: memref<1x128xf32, #tpu.memory_space<vmem>>, %arg7: memref<16x128xf32, #tpu.memory_space<vmem>>, %arg8: memref<16x128xf32, #tpu.memory_space<vmem>>) attributes {dimension_semantics = [#tpu.dimension_semantics<parallel>, #tpu.dimension_semantics<arbitrary>], iteration_bounds = array<i64: 1, 1>, scalar_prefetch = 0 : i64, scratch_operands = 1 : i64, tpu.core_type = #tpu.core_type<tc>, window_params = [{transform_indices = @transform_0, window_bounds = array<i64: 16, 128>}, {pipeline_mode = #tpu.pipeline_mode<synchronous>, transform_indices = @transform_1, window_bounds = array<i64: 1, 128>}, {pipeline_mode = #tpu.pipeline_mode<synchronous>, transform_indices = @transform_2, window_bounds = array<i64: 1, 128>}, {pipeline_mode = #tpu.pipeline_mode<synchronous>, transform_indices = @transform_3, window_bounds = array<i64: 128, 128>}, {pipeline_mode = #tpu.pipeline_mode<synchronous>, transform_indices = @transform_4, window_bounds = array<i64: 1, 128>}, {transform_indices = @transform_5, window_bounds = array<i64: 16, 128>}]} {
    %c0_i32 = arith.constant 0 : i32
    %0 = arith.cmpi eq, %arg1, %c0_i32 : i32
    %1 = arith.extui %0 : i1 to i32
    %c0_i32_0 = arith.constant 0 : i32
    %2 = arith.cmpi ne, %1, %c0_i32_0 : i32
    scf.if %2 {
      %c0_9 = arith.constant 0 : index
      %c0_10 = arith.constant 0 : index
      %15 = vector.load %arg2[%c0_9, %c0_10] : memref<16x128xf32, #tpu.memory_space<vmem>>, vector<16x128xf32>
      %16 = tpu.iota {dimensions = array<i32: 1>} : vector<1x128xi32>
      %c32_i32 = arith.constant 32 : i32
      %17 = vector.broadcast %c32_i32 : i32 to vector<1x128xi32>
      %18 = arith.cmpi slt, %16, %17 : vector<1x128xi32>
      %cst_11 = arith.constant dense<0.000000e+00> : vector<16xf32>
      %19 = vector.multi_reduction <add>, %15, %cst_11 [1] : vector<16x128xf32> to vector<16xf32>
      %20 = vector.shape_cast %19 : vector<16xf32> to vector<16x1xf32>
      %cst_12 = arith.constant 3.125000e-02 : f32
      %21 = vector.broadcast %cst_12 : f32 to vector<16x1xf32>
      %22 = arith.mulf %20, %21 : vector<16x1xf32>
      %23 = vector.broadcast %22 : vector<16x1xf32> to vector<16x128xf32>
      %24 = arith.subf %15, %23 : vector<16x128xf32>
      %cst_13 = arith.constant 0.000000e+00 : f32
      %25 = vector.shape_cast %18 : vector<1x128xi1> to vector<1x128xi1>
      %26 = vector.broadcast %25 : vector<1x128xi1> to vector<16x128xi1>
      %27 = vector.broadcast %cst_13 : f32 to vector<16x128xf32>
      %28 = arith.select %26, %24, %27 : vector<16x128xi1>, vector<16x128xf32>
      %29 = arith.mulf %28, %28 : vector<16x128xf32>
      %cst_14 = arith.constant dense<0.000000e+00> : vector<16xf32>
      %30 = vector.multi_reduction <add>, %29, %cst_14 [1] : vector<16x128xf32> to vector<16xf32>
      %31 = vector.shape_cast %30 : vector<16xf32> to vector<16x1xf32>
      %cst_15 = arith.constant 3.125000e-02 : f32
      %32 = vector.broadcast %cst_15 : f32 to vector<16x1xf32>
      %33 = arith.mulf %31, %32 : vector<16x1xf32>
      %cst_16 = arith.constant 9.99999974E-6 : f32
      %34 = vector.broadcast %cst_16 : f32 to vector<16x1xf32>
      %35 = arith.addf %33, %34 : vector<16x1xf32>
      %36 = math.rsqrt %35 : vector<16x1xf32>
      %37 = vector.broadcast %36 : vector<16x1xf32> to vector<16x128xf32>
      %38 = arith.mulf %28, %37 : vector<16x128xf32>
      %c0_17 = arith.constant 0 : index
      %c0_18 = arith.constant 0 : index
      %39 = vector.load %arg3[%c0_17, %c0_18] : memref<1x128xf32, #tpu.memory_space<vmem>>, vector<1x128xf32>
      %40 = vector.broadcast %39 : vector<1x128xf32> to vector<16x128xf32>
      %41 = arith.mulf %38, %40 : vector<16x128xf32>
      %c0_19 = arith.constant 0 : index
      %c0_20 = arith.constant 0 : index
      %42 = vector.load %arg4[%c0_19, %c0_20] : memref<1x128xf32, #tpu.memory_space<vmem>>, vector<1x128xf32>
      %43 = vector.broadcast %42 : vector<1x128xf32> to vector<16x128xf32>
      %44 = arith.addf %41, %43 : vector<16x128xf32>
      %c0_21 = arith.constant 0 : index
      %c0_22 = arith.constant 0 : index
      %45 = vector.load %arg8[%c0_21, %c0_22] : memref<16x128xf32, #tpu.memory_space<vmem>>, vector<16x128xf32>
      tpu.vector_store %arg8[%c0_21, %c0_22], %44 {strides = array<i32>} : memref<16x128xf32, #tpu.memory_space<vmem>>, vector<16x128xf32>,
    } else {
    }
    %c0 = arith.constant 0 : index
    %c0_1 = arith.constant 0 : index
    %3 = vector.load %arg8[%c0, %c0_1] : memref<16x128xf32, #tpu.memory_space<vmem>>, vector<16x128xf32>
    %c0_2 = arith.constant 0 : index
    %c0_3 = arith.constant 0 : index
    %4 = vector.load %arg5[%c0_2, %c0_3] : memref<128x128xf32, #tpu.memory_space<vmem>>, vector<128x128xf32>
    %cst = arith.constant dense<0.000000e+00> : vector<16x128xf32>
    %5 = tpu.matmul %3, %4, %cst {dimension_numbers = #tpu.dot_dimension_numbers<[1], [0], [0], [1], [0, 0, 1, 1], [], []>} : vector<16x128xf32>, vector<128x128xf32>, vector<16x128xf32> -> vector<16x128xf32>
    %c128_i32 = arith.constant 128 : i32
    %6 = arith.muli %arg1, %c128_i32 : i32
    %7 = tpu.assume_multiple %6, 128 : i32
    %c0_4 = arith.constant 0 : index
    %8 = arith.index_cast %7 : i32 to index
    %9 = vector.load %arg2[%c0_4, %8] : memref<16x128xf32, #tpu.memory_space<vmem>>, vector<16x128xf32>
    %c0_5 = arith.constant 0 : index
    %c0_6 = arith.constant 0 : index
    %10 = vector.load %arg6[%c0_5, %c0_6] : memref<1x128xf32, #tpu.memory_space<vmem>>, vector<1x128xf32>
    %11 = vector.broadcast %10 : vector<1x128xf32> to vector<16x128xf32>
    %12 = arith.addf %5, %11 : vector<16x128xf32>
    %13 = arith.addf %12, %9 : vector<16x128xf32>
    %c0_7 = arith.constant 0 : index
    %c0_8 = arith.constant 0 : index
    %14 = vector.load %arg7[%c0_7, %c0_8] : memref<16x128xf32, #tpu.memory_space<vmem>>, vector<16x128xf32>
    tpu.vector_store %arg7[%c0_7, %c0_8], %13 {strides = array<i32>} : memref<16x128xf32, #tpu.memory_space<vmem>>, vector<16x128xf32>,
    return
  }
  func.func @transform_0(%arg0: i32, %arg1: i32) -> (i32, i32) {
    %c0_i32 = arith.constant 0 : i32
    %c0_i32_0 = arith.constant 0 : i32
    return %arg0, %c0_i32 : i32, i32
  }
  func.func @transform_1(%arg0: i32, %arg1: i32) -> (i32, i32) {
    %c0_i32 = arith.constant 0 : i32
    %c0_i32_0 = arith.constant 0 : i32
    %c0_i32_1 = arith.constant 0 : i32
    return %c0_i32, %c0_i32_0 : i32, i32
  }
  func.func @transform_2(%arg0: i32, %arg1: i32) -> (i32, i32) {
    %c0_i32 = arith.constant 0 : i32
    %c0_i32_0 = arith.constant 0 : i32
    %c0_i32_1 = arith.constant 0 : i32
    return %c0_i32, %c0_i32_0 : i32, i32
  }
  func.func @transform_3(%arg0: i32, %arg1: i32) -> (i32, i32) {
    %c0_i32 = arith.constant 0 : i32
    %c0_i32_0 = arith.constant 0 : i32
    return %c0_i32, %arg1 : i32, i32
  }
  func.func @transform_4(%arg0: i32, %arg1: i32) -> (i32, i32) {
    %c0_i32 = arith.constant 0 : i32
    %c0_i32_0 = arith.constant 0 : i32
    return %c0_i32, %arg1 : i32, i32
  }
  func.func @transform_5(%arg0: i32, %arg1: i32) -> (i32, i32) {
    %c0_i32 = arith.constant 0 : i32
    return %arg0, %arg1 : i32, i32
  }
}

</mosaic_0001>

<llo_original>
// kernel: tpu_custom_call.1
$region0: #{tpu_custom_call.1}
  #allocation0 [shape = 'u32[]', space=smem, size = 0x4, offset = 0x4, fixed_abs, tag = 'smem constant byte address 0x4 - core index']
  #allocation1 [shape = 'u32[72,128]{1,0:T(1,128)}', space=vmem, size = 0x9000, scoped, tag = 'internal scratch']
  #allocation2 [shape = 'f32[16,128]{1,0:T(8,128)}', space=vmem, size = 0x2000, scoped, tag = 'scratch operand']
  %s0 = inlined_call_operand.hbm [shape: f32[16,128], index: 0, kind: input, shape index: {}]
  %s1 = inlined_call_operand.hbm [shape: f32[1,128], index: 1, kind: input, shape index: {}]
  %s2 = inlined_call_operand.vmem [shape: f32[1,128], index: 2, kind: input, shape index: {}]
  %s3 = inlined_call_operand.hbm [shape: f32[128,128], index: 3, kind: input, shape index: {}]
  %s4 = inlined_call_operand.vmem [shape: f32[1,128], index: 4, kind: input, shape index: {}]
  %s5 = inlined_call_operand.hbm [shape: f32[16,128], index: 5, kind: output, shape index: {}]
  %s6 = sld [smem:[#allocation0]]
  $region46: #{tpu_custom_call.1} parent=0
    _
  %s8 = ssub.s32 1, %s6
  %s9 = scalar_select 0, %s8, %s6
  $region1: #{tpu_custom_call.1} parent=0
    #allocation3 [shape = 'u8[8192]{0}', space=vmem, size = 0x2000, scoped, tag = 'input window, operand 0, single buffered']
    #allocation4 [shape = 's32[1]{0}', space=sflag, size = 0x4, scoped, tag = 'scoped memory for tpu_custom_call.1']
    #allocation5 [shape = 's32[1]{0}', space=sflag, size = 0x4, scoped, tag = 'scoped memory for tpu_custom_call.1']
    #allocation6 [shape = 'u8[512]{0}', space=vmem, size = 0x400, scoped, tag = 'input window, operand 1, single buffered']
    #allocation7 [shape = 's32[1]{0}', space=sflag, size = 0x4, scoped, tag = 'scoped memory for tpu_custom_call.1']
    #allocation8 [shape = 'u8[65536]{0}', space=vmem, size = 0x10000, scoped, tag = 'input window, operand 3, single buffered']
    #allocation9 [shape = 'u8[8192]{0}', space=vmem, size = 0x2000, scoped, tag = 'output window, operand 0, single buffered']
    %10 = vsyncpa [#allocation4], 0
    %11 = vsyncpa [#allocation7], 0
    %12 = vsyncpa [#allocation5], 0
    // Predicated region
    $region2: #{tpu_custom_call.1} parent=1 // pred_check
      _
    $region3: #{tpu_custom_call.1} parent=1 // pred_check_branch
      %14 = sbr.rel (0) target = $region5
    $region4: #{tpu_custom_call.1} parent=1 // pred_region
      %16 = vsyncadd [#allocation4], 0
      %s17 = sshll.u32 %s0, 4
      %s18 = int_to_ptr.hbm [resolvable:$true] %s17
      %s19 = sshll.u32 [#allocation3], 4
      %s20 = int_to_ptr.vmem [resolvable:$true] %s19
      %25 = dma.hbm_to_vmem [thread:$0]  %s18, 256, %s20, [#allocation4], 128, 128, 8
    $region5: #{tpu_custom_call.1} parent=1 // pred_fallthru
      _
    // Predicated region
    $region6: #{tpu_custom_call.1} parent=1 // pred_check
      _
    $region7: #{tpu_custom_call.1} parent=1 // pred_check_branch
      %27 = sbr.rel (0) target = $region9
    $region8: #{tpu_custom_call.1} parent=1 // pred_region
      %29 = vsyncadd [#allocation7], 0
      %s31 = sshll.u32 %s1, 4
      %s32 = int_to_ptr.hbm [resolvable:$true] %s31
      %s33 = sshll.u32 [#allocation6], 4
      %s34 = int_to_ptr.vmem [resolvable:$true] %s33
      %36 = dma.hbm_to_vmem [thread:$0]  %s32, 16, %s34, [#allocation7]
    $region9: #{tpu_custom_call.1} parent=1 // pred_fallthru
      _
    // Predicated region
    $region10: #{tpu_custom_call.1} parent=1 // pred_check
      _
    $region11: #{tpu_custom_call.1} parent=1 // pred_check_branch
      %38 = sbr.rel (0) target = $region13
    $region12: #{tpu_custom_call.1} parent=1 // pred_region
      _
    $region13: #{tpu_custom_call.1} parent=1 // pred_fallthru
      _
    // Predicated region
    $region14: #{tpu_custom_call.1} parent=1 // pred_check
      _
    $region15: #{tpu_custom_call.1} parent=1 // pred_check_branch
      %40 = sbr.rel (0) target = $region17
    $region16: #{tpu_custom_call.1} parent=1 // pred_region
      %42 = vsyncadd [#allocation7], 0
      %s43 = sshll.u32 %s3, 4
      %s44 = int_to_ptr.hbm [resolvable:$true] %s43
      %s45 = sshll.u32 [#allocation8], 4
      %s46 = int_to_ptr.vmem [resolvable:$true] %s45
      %51 = dma.hbm_to_vmem [thread:$0]  %s44, 2048, %s46, [#allocation7], 128, 128, 8
    $region17: #{tpu_custom_call.1} parent=1 // pred_fallthru
      _
    // Predicated region
    $region18: #{tpu_custom_call.1} parent=1 // pred_check
      _
    $region19: #{tpu_custom_call.1} parent=1 // pred_check_branch
      %53 = sbr.rel (0) target = $region21
    $region20: #{tpu_custom_call.1} parent=1 // pred_region
      _
    $region21: #{tpu_custom_call.1} parent=1 // pred_fallthru
      _
    // Predicated region
    $region22: #{tpu_custom_call.1} parent=1 // pred_check
      _
    $region23: #{tpu_custom_call.1} parent=1 // pred_check_branch
      %55 = sbr.rel (0) target = $region25
    $region24: #{tpu_custom_call.1} parent=1 // pred_region
      %57 = dma.done [#allocation4], 256
    $region25: #{tpu_custom_call.1} parent=1 // pred_fallthru
      _
    // Predicated region
    $region26: #{tpu_custom_call.1} parent=1 // pred_check
      _
    $region27: #{tpu_custom_call.1} parent=1 // pred_check_branch
      %59 = sbr.rel (0) target = $region29
    $region28: #{tpu_custom_call.1} parent=1 // pred_region
      %61 = dma.done [#allocation7], 16
    $region29: #{tpu_custom_call.1} parent=1 // pred_fallthru
      _
    // Predicated region
    $region30: #{tpu_custom_call.1} parent=1 // pred_check
      _
    $region31: #{tpu_custom_call.1} parent=1 // pred_check_branch
      %63 = sbr.rel (0) target = $region33
    $region32: #{tpu_custom_call.1} parent=1 // pred_region
      %65 = dma.done [#allocation7], 2048
    $region33: #{tpu_custom_call.1} parent=1 // pred_fallthru
      _
    %p66 = scmp.eq.s32.totalorder 0, 0
    // Predicated region
    $region34: #{tpu_custom_call.1} parent=1 // pred_check
      %p67 = pneg %p66
    $region35: #{tpu_custom_call.1} parent=1 // pred_check_branch
      %69 = sbr.rel (%p67) target = $region37
    $region36: #{tpu_custom_call.1} parent=1 // pred_region
      %v70 = vld [vmem:[#allocation3] sm:$0xff]
      %v71 = vld [vmem:[#allocation3 + $0x8] sm:$0xff]
      %v72 = vlaneseq
      %v73 = vand.u32 %v72, 127
      %vm74 = vcmp.lt.s32.totalorder %v73, 32
      %75 = vadd.xlane.f32.xlu0 %v70
      %v76 = vpop.xlane.xlu0 %75
      %77 = vadd.xlane.f32.xlu0 %v71
      %v78 = vpop.xlane.xlu0 %77
      %v79 = vmul.f32 %v76, 0.03125
      %v80 = vmul.f32 %v78, 0.03125
      %v81 = vsub.f32 %v70, %v79
      %v82 = vsub.f32 %v71, %v80
      %v83 = vsel %vm74, 1, 0
      %vm84 = vcmp.eq.s32.totalorder %v83, 1
      %v85 = vsel %vm84, %v81, 0.0
      %v86 = vsel %vm84, %v82, 0.0
      %v87 = vmul.f32 %v85, %v85
      %v88 = vmul.f32 %v86, %v86
      %89 = vadd.xlane.f32.xlu0 %v87
      %v90 = vpop.xlane.xlu0 %89
      %91 = vadd.xlane.f32.xlu0 %v88
      %v92 = vpop.xlane.xlu0 %91
      %v93 = vmul.f32 %v90, 0.03125
      %v94 = vmul.f32 %v92, 0.03125
      %v95 = vadd.f32 %v93, 1e-05
      %v96 = vadd.f32 %v94, 1e-05
      %v97 = vrsqrt.pop %v95
      %v98 = vmul.f32 %v97, %v95
      %v99 = vmul.f32 %v98, %v97
      %v100 = vmul.f32 0.5, %v99
      %v101 = vsub.f32 1.5, %v100
      %v102 = vmul.f32 %v97, %v101
      %vm103 = vweird.f32 %v95
      %vm104 = vweird.f32 %v97
      %vm105 = vmor %vm103, %vm104
      %v106 = vsel %vm105, %v97, %v102
      %v107 = vrsqrt.pop %v96
      %v108 = vmul.f32 %v107, %v96
      %v109 = vmul.f32 %v108, %v107
      %v110 = vmul.f32 0.5, %v109
      %v111 = vsub.f32 1.5, %v110
      %v112 = vmul.f32 %v107, %v111
      %vm113 = vweird.f32 %v96
      %vm114 = vweird.f32 %v107
      %vm115 = vmor %vm113, %vm114
      %v116 = vsel %vm115, %v107, %v112
      %v117 = vmul.f32 %v85, %v106
      %v118 = vmul.f32 %v86, %v116
      %v119 = vld [vmem:[#allocation6] sm:$0x1]
      %v121 = vperm.slane %v119, 0
      %v123 = vmul.f32 %v117, %v121
      %v124 = vmul.f32 %v118, %v121
      %v125 = vld [vmem:[%s2] sm:$0x1]
      %v127 = vperm.slane %v125, 0
      %v129 = vadd.f32 %v123, %v127
      %v130 = vadd.f32 %v124, %v127
      %131 = vst [vmem:[#allocation2] sm:$0xff] %v129
      %132 = vst [vmem:[#allocation2 + $0x8] sm:$0xff] %v130
    $region37: #{tpu_custom_call.1} parent=1 // pred_fallthru
      _
    %v133 = vld [vmem:[#allocation2] sm:$0xff]
    %v134 = vld [vmem:[#allocation2 + $0x8] sm:$0xff]
    %v135 = vld [vmem:[#allocation8] sm:$0xff]
    %v136 = vld [vmem:[#allocation8 + $0x8] sm:$0xff]
    %v137 = vld [vmem:[#allocation8 + $0x10] sm:$0xff]
    %v138 = vld [vmem:[#allocation8 + $0x18] sm:$0xff]
    %v139 = vld [vmem:[#allocation8 + $0x20] sm:$0xff]
    %v140 = vld [vmem:[#allocation8 + $0x28] sm:$0xff]
    %v141 = vld [vmem:[#allocation8 + $0x30] sm:$0xff]
    %v142 = vld [vmem:[#allocation8 + $0x38] sm:$0xff]
    %v143 = vld [vmem:[#allocation8 + $0x40] sm:$0xff]
    %v144 = vld [vmem:[#allocation8 + $0x48] sm:$0xff]
    %v145 = vld [vmem:[#allocation8 + $0x50] sm:$0xff]
    %v146 = vld [vmem:[#allocation8 + $0x58] sm:$0xff]
    %v147 = vld [vmem:[#allocation8 + $0x60] sm:$0xff]
    %v148 = vld [vmem:[#allocation8 + $0x68] sm:$0xff]
    %v149 = vld [vmem:[#allocation8 + $0x70] sm:$0xff]
    %v150 = vld [vmem:[#allocation8 + $0x78] sm:$0xff]
    %s151 = smul.u32 0, 128
    %s152 = sshra.s32 %s151, 7
    %s153 = sand.u32 %s151, 127
    %s154 = scalar_lea.vmem [#allocation3], %s152
    %v155 = vld [vmem:[%s154] sm:$0xff]
    %v156 = vld [vmem:[%s154 + $0x8] sm:$0xff]
    %v157 = vld [vmem:[%s4] sm:$0x1]
    %v159 = vperm.slane %v157, 0
    %161 = vmatpush.msra.mxu0 %v150
    %162 = vmatpush.msra.mxu0 %v149
    %163 = vmatpush.msra.mxu0 %v148
    %164 = vmatpush.msra.mxu0 %v147
    %165 = vmatpush.msra.mxu0 %v146
    %166 = vmatpush.msra.mxu0 %v145
    %167 = vmatpush.msra.mxu0 %v144
    %168 = vmatpush.msra.mxu0 %v143
    %169 = vmatpush.msra.mxu0 %v142
    %170 = vmatpush.msra.mxu0 %v141
    %171 = vmatpush.msra.mxu0 %v140
    %172 = vmatpush.msra.mxu0 %v139
    %173 = vmatpush.msra.mxu0 %v138
    %174 = vmatpush.msra.mxu0 %v137
    %175 = vmatpush.msra.mxu0 %v136
    %176 = vmatpush.msra.mxu0 %v135
    %177 = vmatmul.f32.gmra.mxu0 %v133
    %v178 = vpop.f32.mrf.mxu0
    %v179 = vadd.f32 %v159, %v178
    %180 = vmatmul.f32.gmra.mxu0 %v134
    %v181 = vpop.f32.mrf.mxu0
    %v182 = vadd.f32 %v159, %v181
    %183 = vdwg.mxu0
    %v184 = vadd.f32 %v179, %v155
    %v185 = vadd.f32 %v182, %v156
    %186 = vst [vmem:[#allocation9] sm:$0xff] %v184
    %187 = vst [vmem:[#allocation9 + $0x8] sm:$0xff] %v185
    // Predicated region
    $region38: #{tpu_custom_call.1} parent=1 // pred_check
      _
    $region39: #{tpu_custom_call.1} parent=1 // pred_check_branch
      %189 = sbr.rel (0) target = $region41
    $region40: #{tpu_custom_call.1} parent=1 // pred_region
      %191 = vsyncadd [#allocation5], 0
      %s192 = sshll.u32 [#allocation9], 4
      %s193 = int_to_ptr.vmem [resolvable:$true] %s192
      %s194 = sshll.u32 %s5, 4
      %s195 = int_to_ptr.hbm [resolvable:$true] %s194
      %200 = dma.vmem_to_hbm [thread:$0]  %s193, 256, %s195, [#allocation5], 128, 128, 8
    $region41: #{tpu_custom_call.1} parent=1 // pred_fallthru
      _
    // Predicated region
    $region42: #{tpu_custom_call.1} parent=1 // pred_check
      _
    $region43: #{tpu_custom_call.1} parent=1 // pred_check_branch
      %202 = sbr.rel (0) target = $region45
    $region44: #{tpu_custom_call.1} parent=1 // pred_region
      %204 = dma.done [#allocation5], 256
    $region45: #{tpu_custom_call.1} parent=1 // pred_fallthru
      _
    %205 = vsyncpa [#allocation4], 1
    %206 = vsyncpa [#allocation7], 1
    %207 = vsyncpa [#allocation5], 1

</llo_original>
